<compile_context>
chip_gen: v7x
topology: tpu7x:2x2x1
jax: 0.10.0
libtpu: 0.0.40
codegen_flags: <defaults>
</compile_context>

<pallas_src>
import functools
import math

import jax
import jax.numpy as jnp
from jax.experimental import pallas as pl
from jax.experimental.pallas import tpu as pltpu


# ---------------------------------------------------------------------------
# Linear (x @ W + b), tiled over rows with pipelined DMA
# ---------------------------------------------------------------------------
def linear_kernel(x_ref, w_ref, b_ref, o_ref):
    # x: (bm, K) bf16, w: (K, OUT) bf16, b: (1, OUT) f32 -> o: (bm, OUT)
    acc = jnp.dot(x_ref[...], w_ref[...], preferred_element_type=jnp.float32)
    o_ref[...] = (acc + b_ref[...]).astype(o_ref.dtype)


def linear(x, w, b, *, out_dtype=jnp.float32, block_rows=512):
    # TODO(synk): add a K-dim ("arbitrary") grid axis + f32 VMEM accumulator if
    # K*OUT ever outgrows a single VMEM-resident weight block.
    M, K = x.shape
    OUT = w.shape[1]
    bm = M if M <= block_rows else block_rows  # full M or 512-row tiles (mult of 8)
    grid = (pl.cdiv(M, bm),)
    return pl.pallas_call(
        linear_kernel,
        out_shape=jax.ShapeDtypeStruct((M, OUT), out_dtype),
        grid=grid,
        in_specs=[
            pl.BlockSpec((bm, K), lambda i: (i, 0)),
            pl.BlockSpec((K, OUT), lambda i: (0, 0)),
            pl.BlockSpec((1, OUT), lambda i: (0, 0)),
        ],
        out_specs=pl.BlockSpec((bm, OUT), lambda i: (i, 0)),
        compiler_params=pltpu.CompilerParams(
            dimension_semantics=("parallel",)),
    )(x, w, b.reshape(1, OUT))


# ---------------------------------------------------------------------------
# Attention: one grid step per (batch, q-block), all heads per step
# ---------------------------------------------------------------------------
def attn_kernel(q_ref, k_ref, v_ref, m_ref, o_ref, *, num_heads, d_k, d_v):
    # q: (bq, H*d_k) bf16 (scale already folded into W_Q)
    # k: (k_len, H*d_k) bf16, v: (k_len, H*d_v) bf16
    # m: (bq, k_len) bf16  (1.0 = masked)
    # o: (bq, H*d_v) bf16  (lane-dense output block)
    q = q_ref[...]
    k = k_ref[...]
    v = v_ref[...]
    masked = m_ref[...].astype(jnp.float32) > 0.5  # compare once for all heads

    for h in range(num_heads):  # static unroll; each head is a lane slice
        q_h = q[:, h * d_k:(h + 1) * d_k]
        k_h = k[:, h * d_k:(h + 1) * d_k]
        v_h = v[:, h * d_v:(h + 1) * d_v]

        # scores = q_h @ k_h^T without materializing a transpose (contract last dims)
        s = jax.lax.dot_general(
            q_h, k_h, (((1,), (1,)), ((), ())),
            preferred_element_type=jnp.float32)
        # masked_fill semantics of the reference (exact -10000 at masked positions)
        s = jnp.where(masked, jnp.float32(-10000.0), s)

        # softmax in f32 (safe on v5e), divide moved to the EUP via reciprocal
        s_max = jnp.max(s, axis=-1, keepdims=True)
        e = jnp.exp(s - s_max)
        p = e * pl.reciprocal(jnp.sum(e, axis=-1, keepdims=True), approx=True)

        # dropout(p=0.0) is the identity
        # TODO(synk): stochastic dropout (p>0) not implemented.
        out_h = jnp.dot(p.astype(v_h.dtype), v_h,
                        preferred_element_type=jnp.float32)
        o_ref[:, h * d_v:(h + 1) * d_v] = out_h.astype(o_ref.dtype)


def attention(q, k, v, mask, *, num_heads, d_k, d_v, block_q=256):
    # q: (N, q_len, H*d_k), k: (N, k_len, H*d_k), v: (N, k_len, H*d_v), all bf16
    # mask: (N, q_len, k_len) bf16
    # TODO(synk): for long sequences, tile k_len with an "arbitrary" grid axis +
    # online softmax (flash pattern) so VMEM stays O(tile) instead of O(k_len).
    N, q_len, qdim = q.shape
    k_len = k.shape[1]
    bq = q_len if q_len <= block_q else block_q
    grid = (N, pl.cdiv(q_len, bq))
    kernel = functools.partial(attn_kernel, num_heads=num_heads, d_k=d_k, d_v=d_v)
    return pl.pallas_call(
        kernel,
        out_shape=jax.ShapeDtypeStruct((N, q_len, num_heads * d_v), jnp.bfloat16),
        grid=grid,
        in_specs=[
            pl.BlockSpec((None, bq, qdim), lambda b, i: (b, i, 0)),
            pl.BlockSpec((None, k_len, num_heads * d_k), lambda b, i: (b, 0, 0)),
            pl.BlockSpec((None, k_len, num_heads * d_v), lambda b, i: (b, 0, 0)),
            pl.BlockSpec((None, bq, k_len), lambda b, i: (b, i, 0)),
        ],
        out_specs=pl.BlockSpec((None, bq, num_heads * d_v), lambda b, i: (b, i, 0)),
        compiler_params=pltpu.CompilerParams(
            dimension_semantics=("parallel", "parallel")),
    )(q, k, v, mask)


# ---------------------------------------------------------------------------
# Module wrapper
# ---------------------------------------------------------------------------
def init_params(key, d_k, d_v, d_model, num_heads):
    """Deterministic parameter init mirroring the PyTorch module's __init__."""
    ks = jax.random.split(key, 8)
    std_qk = math.sqrt(2.0 / (d_model + d_k))
    std_v = math.sqrt(2.0 / (d_model + d_v))

    def bias(k, fan_in, size):
        bound = 1.0 / math.sqrt(fan_in)
        return jax.random.uniform(k, (size,), jnp.float32, -bound, bound)

    return {
        # stored as (in_features, out_features) == PyTorch W.T
        "wq": std_qk * jax.random.normal(ks[0], (d_model, d_k * num_heads), jnp.float32),
        "bq": bias(ks[1], d_model, d_k * num_heads),
        "wk": std_qk * jax.random.normal(ks[2], (d_model, d_k * num_heads), jnp.float32),
        "bk": bias(ks[3], d_model, d_k * num_heads),
        "wv": std_v * jax.random.normal(ks[4], (d_model, d_v * num_heads), jnp.float32),
        "bv": bias(ks[5], d_model, d_v * num_heads),
        "wo": std_v * jax.random.normal(ks[6], (d_v * num_heads, d_model), jnp.float32),
        "bo": bias(ks[7], d_v * num_heads, d_model),
    }


def multi_head_attention(params, Q, K, V, attn_mask, *, d_k, d_v, num_heads):
    N, q_len, d_model = Q.shape
    k_len = K.shape[1]
    H = num_heads
    scale = 1.0 / math.sqrt(d_k)

    # bf16 operands for the MXU, f32 accumulation inside the kernels.
    # Fold the 1/sqrt(d_k) score scaling into W_Q / b_Q (mathematically identical).
    wq = (params["wq"] * scale).astype(jnp.bfloat16)
    bq = (params["bq"] * scale).astype(jnp.float32)
    wk = params["wk"].astype(jnp.bfloat16)
    wv = params["wv"].astype(jnp.bfloat16)
    wo = params["wo"].astype(jnp.bfloat16)

    xq = Q.reshape(N * q_len, d_model).astype(jnp.bfloat16)
    xk = K.reshape(N * k_len, d_model).astype(jnp.bfloat16)
    xv = V.reshape(N * k_len, d_model).astype(jnp.bfloat16)

    # TODO(synk): when Q is K is V (self-attention) the three projections could be
    # fused into one X @ [Wq|Wk|Wv] kernel; kept separate since the module allows
    # distinct Q/K/V inputs (cross-attention).
    q = linear(xq, wq, bq, out_dtype=jnp.bfloat16).reshape(N, q_len, H * d_k)
    k = linear(xk, wk, params["bk"], out_dtype=jnp.bfloat16).reshape(N, k_len, H * d_k)
    v = linear(xv, wv, params["bv"], out_dtype=jnp.bfloat16).reshape(N, k_len, H * d_v)

    # bf16 mask stream (4x less HBM than f32); 1.0 = masked position.
    if attn_mask is None:
        mask = jnp.zeros((N, q_len, k_len), jnp.bfloat16)
    else:
        mask = attn_mask.astype(jnp.bfloat16)

    # (N, q_len, H*d_v) bf16, already in "merged heads" layout -> no transpose needed.
    ctx = attention(q, k, v, mask, num_heads=H, d_k=d_k, d_v=d_v)

    out = linear(ctx.reshape(N * q_len, H * d_v), wo, params["bo"],
                 out_dtype=jnp.float32)
    return out.reshape(N, q_len, d_model)


# ---------------------------------------------------------------------------
if __name__ == "__main__":
    N = 2
    seq = 8
    d_model = 32
    num_heads = 4
    d_k = 8
    d_v = 8

    key = jax.random.PRNGKey(0)
    k_params, k_q, k_k, k_v = jax.random.split(key, 4)

    params = init_params(k_params, d_k, d_v, d_model, num_heads)

    Q = jax.random.normal(k_q, (N, seq, d_model), jnp.float32)
    K = jax.random.normal(k_k, (N, seq, d_model), jnp.float32)
    V = jax.random.normal(k_v, (N, seq, d_model), jnp.float32)

    # causal mask: True (masked) where key index > query index
    causal = jnp.triu(jnp.ones((seq, seq), dtype=bool), k=1)
    attn_mask = jnp.broadcast_to(causal, (N, seq, seq))

    fwd = jax.jit(functools.partial(
        multi_head_attention, d_k=d_k, d_v=d_v, num_heads=num_heads))
    out = fwd(params, Q, K, V, attn_mask)
    out = jax.block_until_ready(out)

    assert out.shape == (N, seq, d_model)
    assert bool(jnp.all(jnp.isfinite(out)))
    print("KERNEL_OK")
</pallas_src>

<mosaic_0001>
module attributes {stable_mosaic.version = 11 : i64} {
  func.func @linear_kernel(%arg0: i32, %arg1: memref<16x32xbf16, #tpu.memory_space<vmem>>, %arg2: memref<32x32xbf16, #tpu.memory_space<vmem>>, %arg3: memref<1x32xf32, #tpu.memory_space<vmem>>, %arg4: memref<16x32xbf16, #tpu.memory_space<vmem>>) attributes {dimension_semantics = [#tpu.dimension_semantics<parallel>], iteration_bounds = array<i64: 1>, scalar_prefetch = 0 : i64, scratch_operands = 0 : i64, tpu.core_type = #tpu.core_type<tc>, window_params = [{transform_indices = @transform_0, window_bounds = array<i64: 16, 32>}, {pipeline_mode = #tpu.pipeline_mode<synchronous>, transform_indices = @transform_1, window_bounds = array<i64: 32, 32>}, {pipeline_mode = #tpu.pipeline_mode<synchronous>, transform_indices = @transform_2, window_bounds = array<i64: 1, 32>}, {transform_indices = @transform_3, window_bounds = array<i64: 16, 32>}]} {
    %c0 = arith.constant 0 : index
    %c0_0 = arith.constant 0 : index
    %0 = vector.load %arg1[%c0, %c0_0] : memref<16x32xbf16, #tpu.memory_space<vmem>>, vector<16x32xbf16>
    %c0_1 = arith.constant 0 : index
    %c0_2 = arith.constant 0 : index
    %1 = vector.load %arg2[%c0_1, %c0_2] : memref<32x32xbf16, #tpu.memory_space<vmem>>, vector<32x32xbf16>
    %cst = arith.constant dense<0.000000e+00> : vector<16x32xf32>
    %2 = tpu.matmul %0, %1, %cst {dimension_numbers = #tpu.dot_dimension_numbers<[1], [0], [0], [1], [0, 0, 1, 1], [], []>} : vector<16x32xbf16>, vector<32x32xbf16>, vector<16x32xf32> -> vector<16x32xf32>
    %c0_3 = arith.constant 0 : index
    %c0_4 = arith.constant 0 : index
    %3 = vector.load %arg3[%c0_3, %c0_4] : memref<1x32xf32, #tpu.memory_space<vmem>>, vector<1x32xf32>
    %4 = vector.broadcast %3 : vector<1x32xf32> to vector<16x32xf32>
    %5 = arith.addf %2, %4 : vector<16x32xf32>
    %6 = arith.truncf %5 : vector<16x32xf32> to vector<16x32xbf16>
    %c0_5 = arith.constant 0 : index
    %c0_6 = arith.constant 0 : index
    %7 = vector.load %arg4[%c0_5, %c0_6] : memref<16x32xbf16, #tpu.memory_space<vmem>>, vector<16x32xbf16>
    tpu.vector_store %arg4[%c0_5, %c0_6], %6 {strides = array<i32>} : memref<16x32xbf16, #tpu.memory_space<vmem>>, vector<16x32xbf16>,
    return
  }
  func.func @transform_0(%arg0: i32) -> (i32, i32) {
    %c0_i32 = arith.constant 0 : i32
    %c0_i32_0 = arith.constant 0 : i32
    return %arg0, %c0_i32 : i32, i32
  }
  func.func @transform_1(%arg0: i32) -> (i32, i32) {
    %c0_i32 = arith.constant 0 : i32
    %c0_i32_0 = arith.constant 0 : i32
    %c0_i32_1 = arith.constant 0 : i32
    return %c0_i32, %c0_i32_0 : i32, i32
  }
  func.func @transform_2(%arg0: i32) -> (i32, i32) {
    %c0_i32 = arith.constant 0 : i32
    %c0_i32_0 = arith.constant 0 : i32
    %c0_i32_1 = arith.constant 0 : i32
    return %c0_i32, %c0_i32_0 : i32, i32
  }
  func.func @transform_3(%arg0: i32) -> (i32, i32) {
    %c0_i32 = arith.constant 0 : i32
    %c0_i32_0 = arith.constant 0 : i32
    return %arg0, %c0_i32 : i32, i32
  }
}

module attributes {stable_mosaic.version = 11 : i64} {
  func.func @attn_kernel(%arg0: i32, %arg1: i32, %arg2: memref<1x8x32xbf16, #tpu.memory_space<vmem>>, %arg3: memref<1x8x32xbf16, #tpu.memory_space<vmem>>, %arg4: memref<1x8x32xbf16, #tpu.memory_space<vmem>>, %arg5: memref<1x8x8xbf16, #tpu.memory_space<vmem>>, %arg6: memref<1x8x32xbf16, #tpu.memory_space<vmem>>) attributes {dimension_semantics = [#tpu.dimension_semantics<parallel>, #tpu.dimension_semantics<parallel>], iteration_bounds = array<i64: 2, 1>, scalar_prefetch = 0 : i64, scratch_operands = 0 : i64, tpu.core_type = #tpu.core_type<tc>, window_params = [{transform_indices = @transform_0, window_bounds = array<i64: 1, 8, 32>}, {transform_indices = @transform_1, window_bounds = array<i64: 1, 8, 32>}, {transform_indices = @transform_2, window_bounds = array<i64: 1, 8, 32>}, {transform_indices = @transform_3, window_bounds = array<i64: 1, 8, 8>}, {transform_indices = @transform_4, window_bounds = array<i64: 1, 8, 32>}]} {
    %c0 = arith.constant 0 : index
    %c0_0 = arith.constant 0 : index
    %c0_1 = arith.constant 0 : index
    %0 = vector.load %arg2[%c0, %c0_0, %c0_1] : memref<1x8x32xbf16, #tpu.memory_space<vmem>>, vector<1x8x32xbf16>
    %1 = vector.shape_cast %0 : vector<1x8x32xbf16> to vector<8x32xbf16>
    %c0_2 = arith.constant 0 : index
    %c0_3 = arith.constant 0 : index
    %c0_4 = arith.constant 0 : index
    %2 = vector.load %arg3[%c0_2, %c0_3, %c0_4] : memref<1x8x32xbf16, #tpu.memory_space<vmem>>, vector<1x8x32xbf16>
    %3 = vector.shape_cast %2 : vector<1x8x32xbf16> to vector<8x32xbf16>
    %c0_5 = arith.constant 0 : index
    %c0_6 = arith.constant 0 : index
    %c0_7 = arith.constant 0 : index
    %4 = vector.load %arg4[%c0_5, %c0_6, %c0_7] : memref<1x8x32xbf16, #tpu.memory_space<vmem>>, vector<1x8x32xbf16>
    %5 = vector.shape_cast %4 : vector<1x8x32xbf16> to vector<8x32xbf16>
    %c0_8 = arith.constant 0 : index
    %c0_9 = arith.constant 0 : index
    %c0_10 = arith.constant 0 : index
    %6 = vector.load %arg5[%c0_8, %c0_9, %c0_10] : memref<1x8x8xbf16, #tpu.memory_space<vmem>>, vector<1x8x8xbf16>
    %7 = vector.shape_cast %6 : vector<1x8x8xbf16> to vector<8x8xbf16>
    %8 = arith.extf %7 : vector<8x8xbf16> to vector<8x8xf32>
    %cst = arith.constant 5.000000e-01 : f32
    %9 = vector.broadcast %cst : f32 to vector<8x8xf32>
    %10 = arith.cmpf ogt, %8, %9 : vector<8x8xf32>
    %11 = vector.extract_strided_slice %1 {offsets = [0, 0], sizes = [8, 8], strides = [1, 1]} : vector<8x32xbf16> to vector<8x8xbf16>
    %12 = vector.extract_strided_slice %3 {offsets = [0, 0], sizes = [8, 8], strides = [1, 1]} : vector<8x32xbf16> to vector<8x8xbf16>
    %13 = vector.extract_strided_slice %5 {offsets = [0, 0], sizes = [8, 8], strides = [1, 1]} : vector<8x32xbf16> to vector<8x8xbf16>
    %cst_11 = arith.constant dense<0.000000e+00> : vector<8x8xf32>
    %14 = tpu.matmul %11, %12, %cst_11 {dimension_numbers = #tpu.dot_dimension_numbers<[1], [1], [0], [0], [0, 0, 1, 0], [], []>} : vector<8x8xbf16>, vector<8x8xbf16>, vector<8x8xf32> -> vector<8x8xf32>
    %cst_12 = arith.constant -1.000000e+04 : f32
    %15 = vector.broadcast %cst_12 : f32 to vector<8x8xf32>
    %16 = arith.select %10, %15, %14 : vector<8x8xi1>, vector<8x8xf32>
    %cst_13 = arith.constant dense<0xFF800000> : vector<8xf32>
    %17 = vector.multi_reduction <maximumf>, %16, %cst_13 [1] : vector<8x8xf32> to vector<8xf32>
    %18 = vector.shape_cast %17 : vector<8xf32> to vector<8x1xf32>
    %19 = vector.broadcast %18 : vector<8x1xf32> to vector<8x8xf32>
    %20 = arith.subf %16, %19 : vector<8x8xf32>
    %21 = math.exp %20 : vector<8x8xf32>
    %cst_14 = arith.constant dense<0.000000e+00> : vector<8xf32>
    %22 = vector.multi_reduction <add>, %21, %cst_14 [1] : vector<8x8xf32> to vector<8xf32>
    %23 = vector.shape_cast %22 : vector<8xf32> to vector<8x1xf32>
    %24 = tpu.reciprocal %23 {approx = true} : vector<8x1xf32> -> vector<8x1xf32>
    %25 = vector.broadcast %24 : vector<8x1xf32> to vector<8x8xf32>
    %26 = arith.mulf %21, %25 : vector<8x8xf32>
    %27 = arith.truncf %26 : vector<8x8xf32> to vector<8x8xbf16>
    %cst_15 = arith.constant dense<0.000000e+00> : vector<8x8xf32>
    %28 = tpu.matmul %27, %13, %cst_15 {dimension_numbers = #tpu.dot_dimension_numbers<[1], [0], [0], [1], [0, 0, 1, 1], [], []>} : vector<8x8xbf16>, vector<8x8xbf16>, vector<8x8xf32> -> vector<8x8xf32>
    %29 = arith.truncf %28 : vector<8x8xf32> to vector<8x8xbf16>
    %c0_16 = arith.constant 0 : index
    %c0_17 = arith.constant 0 : index
    %c0_18 = arith.constant 0 : index
    %30 = vector.load %arg6[%c0_16, %c0_17, %c0_18] : memref<1x8x32xbf16, #tpu.memory_space<vmem>>, vector<1x8x8xbf16>
    %31 = vector.shape_cast %30 : vector<1x8x8xbf16> to vector<8x8xbf16>
    %32 = vector.shape_cast %29 : vector<8x8xbf16> to vector<1x8x8xbf16>
    tpu.vector_store %arg6[%c0_16, %c0_17, %c0_18], %32 {strides = array<i32>} : memref<1x8x32xbf16, #tpu.memory_space<vmem>>, vector<1x8x8xbf16>,
    %33 = vector.extract_strided_slice %1 {offsets = [0, 8], sizes = [8, 8], strides = [1, 1]} : vector<8x32xbf16> to vector<8x8xbf16>
    %34 = vector.extract_strided_slice %3 {offsets = [0, 8], sizes = [8, 8], strides = [1, 1]} : vector<8x32xbf16> to vector<8x8xbf16>
    %35 = vector.extract_strided_slice %5 {offsets = [0, 8], sizes = [8, 8], strides = [1, 1]} : vector<8x32xbf16> to vector<8x8xbf16>
    %cst_19 = arith.constant dense<0.000000e+00> : vector<8x8xf32>
    %36 = tpu.matmul %33, %34, %cst_19 {dimension_numbers = #tpu.dot_dimension_numbers<[1], [1], [0], [0], [0, 0, 1, 0], [], []>} : vector<8x8xbf16>, vector<8x8xbf16>, vector<8x8xf32> -> vector<8x8xf32>
    %cst_20 = arith.constant -1.000000e+04 : f32
    %37 = vector.broadcast %cst_20 : f32 to vector<8x8xf32>
    %38 = arith.select %10, %37, %36 : vector<8x8xi1>, vector<8x8xf32>
    %cst_21 = arith.constant dense<0xFF800000> : vector<8xf32>
    %39 = vector.multi_reduction <maximumf>, %38, %cst_21 [1] : vector<8x8xf32> to vector<8xf32>
    %40 = vector.shape_cast %39 : vector<8xf32> to vector<8x1xf32>
    %41 = vector.broadcast %40 : vector<8x1xf32> to vector<8x8xf32>
    %42 = arith.subf %38, %41 : vector<8x8xf32>
    %43 = math.exp %42 : vector<8x8xf32>
    %cst_22 = arith.constant dense<0.000000e+00> : vector<8xf32>
    %44 = vector.multi_reduction <add>, %43, %cst_22 [1] : vector<8x8xf32> to vector<8xf32>
    %45 = vector.shape_cast %44 : vector<8xf32> to vector<8x1xf32>
    %46 = tpu.reciprocal %45 {approx = true} : vector<8x1xf32> -> vector<8x1xf32>
    %47 = vector.broadcast %46 : vector<8x1xf32> to vector<8x8xf32>
    %48 = arith.mulf %43, %47 : vector<8x8xf32>
    %49 = arith.truncf %48 : vector<8x8xf32> to vector<8x8xbf16>
    %cst_23 = arith.constant dense<0.000000e+00> : vector<8x8xf32>
    %50 = tpu.matmul %49, %35, %cst_23 {dimension_numbers = #tpu.dot_dimension_numbers<[1], [0], [0], [1], [0, 0, 1, 1], [], []>} : vector<8x8xbf16>, vector<8x8xbf16>, vector<8x8xf32> -> vector<8x8xf32>
    %51 = arith.truncf %50 : vector<8x8xf32> to vector<8x8xbf16>
    %c0_24 = arith.constant 0 : index
    %c0_25 = arith.constant 0 : index
    %c8 = arith.constant 8 : index
    %52 = vector.load %arg6[%c0_24, %c0_25, %c8] : memref<1x8x32xbf16, #tpu.memory_space<vmem>>, vector<1x8x8xbf16>
    %53 = vector.shape_cast %52 : vector<1x8x8xbf16> to vector<8x8xbf16>
    %54 = vector.shape_cast %51 : vector<8x8xbf16> to vector<1x8x8xbf16>
    tpu.vector_store %arg6[%c0_24, %c0_25, %c8], %54 {strides = array<i32>} : memref<1x8x32xbf16, #tpu.memory_space<vmem>>, vector<1x8x8xbf16>,
    %55 = vector.extract_strided_slice %1 {offsets = [0, 16], sizes = [8, 8], strides = [1, 1]} : vector<8x32xbf16> to vector<8x8xbf16>
    %56 = vector.extract_strided_slice %3 {offsets = [0, 16], sizes = [8, 8], strides = [1, 1]} : vector<8x32xbf16> to vector<8x8xbf16>
    %57 = vector.extract_strided_slice %5 {offsets = [0, 16], sizes = [8, 8], strides = [1, 1]} : vector<8x32xbf16> to vector<8x8xbf16>
    %cst_26 = arith.constant dense<0.000000e+00> : vector<8x8xf32>
    %58 = tpu.matmul %55, %56, %cst_26 {dimension_numbers = #tpu.dot_dimension_numbers<[1], [1], [0], [0], [0, 0, 1, 0], [], []>} : vector<8x8xbf16>, vector<8x8xbf16>, vector<8x8xf32> -> vector<8x8xf32>
    %cst_27 = arith.constant -1.000000e+04 : f32
    %59 = vector.broadcast %cst_27 : f32 to vector<8x8xf32>
    %60 = arith.select %10, %59, %58 : vector<8x8xi1>, vector<8x8xf32>
    %cst_28 = arith.constant dense<0xFF800000> : vector<8xf32>
    %61 = vector.multi_reduction <maximumf>, %60, %cst_28 [1] : vector<8x8xf32> to vector<8xf32>
    %62 = vector.shape_cast %61 : vector<8xf32> to vector<8x1xf32>
    %63 = vector.broadcast %62 : vector<8x1xf32> to vector<8x8xf32>
    %64 = arith.subf %60, %63 : vector<8x8xf32>
    %65 = math.exp %64 : vector<8x8xf32>
    %cst_29 = arith.constant dense<0.000000e+00> : vector<8xf32>
    %66 = vector.multi_reduction <add>, %65, %cst_29 [1] : vector<8x8xf32> to vector<8xf32>
    %67 = vector.shape_cast %66 : vector<8xf32> to vector<8x1xf32>
    %68 = tpu.reciprocal %67 {approx = true} : vector<8x1xf32> -> vector<8x1xf32>
    %69 = vector.broadcast %68 : vector<8x1xf32> to vector<8x8xf32>
    %70 = arith.mulf %65, %69 : vector<8x8xf32>
    %71 = arith.truncf %70 : vector<8x8xf32> to vector<8x8xbf16>
    %cst_30 = arith.constant dense<0.000000e+00> : vector<8x8xf32>
    %72 = tpu.matmul %71, %57, %cst_30 {dimension_numbers = #tpu.dot_dimension_numbers<[1], [0], [0], [1], [0, 0, 1, 1], [], []>} : vector<8x8xbf16>, vector<8x8xbf16>, vector<8x8xf32> -> vector<8x8xf32>
    %73 = arith.truncf %72 : vector<8x8xf32> to vector<8x8xbf16>
    %c0_31 = arith.constant 0 : index
    %c0_32 = arith.constant 0 : index
    %c16 = arith.constant 16 : index
    %74 = vector.load %arg6[%c0_31, %c0_32, %c16] : memref<1x8x32xbf16, #tpu.memory_space<vmem>>, vector<1x8x8xbf16>
    %75 = vector.shape_cast %74 : vector<1x8x8xbf16> to vector<8x8xbf16>
    %76 = vector.shape_cast %73 : vector<8x8xbf16> to vector<1x8x8xbf16>
    tpu.vector_store %arg6[%c0_31, %c0_32, %c16], %76 {strides = array<i32>} : memref<1x8x32xbf16, #tpu.memory_space<vmem>>, vector<1x8x8xbf16>,
    %77 = vector.extract_strided_slice %1 {offsets = [0, 24], sizes = [8, 8], strides = [1, 1]} : vector<8x32xbf16> to vector<8x8xbf16>
    %78 = vector.extract_strided_slice %3 {offsets = [0, 24], sizes = [8, 8], strides = [1, 1]} : vector<8x32xbf16> to vector<8x8xbf16>
    %79 = vector.extract_strided_slice %5 {offsets = [0, 24], sizes = [8, 8], strides = [1, 1]} : vector<8x32xbf16> to vector<8x8xbf16>
    %cst_33 = arith.constant dense<0.000000e+00> : vector<8x8xf32>
    %80 = tpu.matmul %77, %78, %cst_33 {dimension_numbers = #tpu.dot_dimension_numbers<[1], [1], [0], [0], [0, 0, 1, 0], [], []>} : vector<8x8xbf16>, vector<8x8xbf16>, vector<8x8xf32> -> vector<8x8xf32>
    %cst_34 = arith.constant -1.000000e+04 : f32
    %81 = vector.broadcast %cst_34 : f32 to vector<8x8xf32>
    %82 = arith.select %10, %81, %80 : vector<8x8xi1>, vector<8x8xf32>
    %cst_35 = arith.constant dense<0xFF800000> : vector<8xf32>
    %83 = vector.multi_reduction <maximumf>, %82, %cst_35 [1] : vector<8x8xf32> to vector<8xf32>
    %84 = vector.shape_cast %83 : vector<8xf32> to vector<8x1xf32>
    %85 = vector.broadcast %84 : vector<8x1xf32> to vector<8x8xf32>
    %86 = arith.subf %82, %85 : vector<8x8xf32>
    %87 = math.exp %86 : vector<8x8xf32>
    %cst_36 = arith.constant dense<0.000000e+00> : vector<8xf32>
    %88 = vector.multi_reduction <add>, %87, %cst_36 [1] : vector<8x8xf32> to vector<8xf32>
    %89 = vector.shape_cast %88 : vector<8xf32> to vector<8x1xf32>
    %90 = tpu.reciprocal %89 {approx = true} : vector<8x1xf32> -> vector<8x1xf32>
    %91 = vector.broadcast %90 : vector<8x1xf32> to vector<8x8xf32>
    %92 = arith.mulf %87, %91 : vector<8x8xf32>
    %93 = arith.truncf %92 : vector<8x8xf32> to vector<8x8xbf16>
    %cst_37 = arith.constant dense<0.000000e+00> : vector<8x8xf32>
    %94 = tpu.matmul %93, %79, %cst_37 {dimension_numbers = #tpu.dot_dimension_numbers<[1], [0], [0], [1], [0, 0, 1, 1], [], []>} : vector<8x8xbf16>, vector<8x8xbf16>, vector<8x8xf32> -> vector<8x8xf32>
    %95 = arith.truncf %94 : vector<8x8xf32> to vector<8x8xbf16>
    %c0_38 = arith.constant 0 : index
    %c0_39 = arith.constant 0 : index
    %c24 = arith.constant 24 : index
    %96 = vector.load %arg6[%c0_38, %c0_39, %c24] : memref<1x8x32xbf16, #tpu.memory_space<vmem>>, vector<1x8x8xbf16>
    %97 = vector.shape_cast %96 : vector<1x8x8xbf16> to vector<8x8xbf16>
    %98 = vector.shape_cast %95 : vector<8x8xbf16> to vector<1x8x8xbf16>
    tpu.vector_store %arg6[%c0_38, %c0_39, %c24], %98 {strides = array<i32>} : memref<1x8x32xbf16, #tpu.memory_space<vmem>>, vector<1x8x8xbf16>,
    return
  }
  func.func @transform_0(%arg0: i32, %arg1: i32) -> (i32, i32, i32) {
    %c0_i32 = arith.constant 0 : i32
    %c0_i32_0 = arith.constant 0 : i32
    return %arg0, %arg1, %c0_i32 : i32, i32, i32
  }
  func.func @transform_1(%arg0: i32, %arg1: i32) -> (i32, i32, i32) {
    %c0_i32 = arith.constant 0 : i32
    %c0_i32_0 = arith.constant 0 : i32
    %c0_i32_1 = arith.constant 0 : i32
    return %arg0, %c0_i32, %c0_i32_0 : i32, i32, i32
  }
  func.func @transform_2(%arg0: i32, %arg1: i32) -> (i32, i32, i32) {
    %c0_i32 = arith.constant 0 : i32
    %c0_i32_0 = arith.constant 0 : i32
    %c0_i32_1 = arith.constant 0 : i32
    return %arg0, %c0_i32, %c0_i32_0 : i32, i32, i32
  }
  func.func @transform_3(%arg0: i32, %arg1: i32) -> (i32, i32, i32) {
    %c0_i32 = arith.constant 0 : i32
    %c0_i32_0 = arith.constant 0 : i32
    return %arg0, %arg1, %c0_i32 : i32, i32, i32
  }
  func.func @transform_4(%arg0: i32, %arg1: i32) -> (i32, i32, i32) {
    %c0_i32 = arith.constant 0 : i32
    %c0_i32_0 = arith.constant 0 : i32
    return %arg0, %arg1, %c0_i32 : i32, i32, i32
  }
}

module attributes {stable_mosaic.version = 11 : i64} {
  func.func @linear_kernel(%arg0: i32, %arg1: memref<16x32xbf16, #tpu.memory_space<vmem>>, %arg2: memref<32x32xbf16, #tpu.memory_space<vmem>>, %arg3: memref<1x32xf32, #tpu.memory_space<vmem>>, %arg4: memref<16x32xf32, #tpu.memory_space<vmem>>) attributes {dimension_semantics = [#tpu.dimension_semantics<parallel>], iteration_bounds = array<i64: 1>, scalar_prefetch = 0 : i64, scratch_operands = 0 : i64, tpu.core_type = #tpu.core_type<tc>, window_params = [{transform_indices = @transform_0, window_bounds = array<i64: 16, 32>}, {pipeline_mode = #tpu.pipeline_mode<synchronous>, transform_indices = @transform_1, window_bounds = array<i64: 32, 32>}, {pipeline_mode = #tpu.pipeline_mode<synchronous>, transform_indices = @transform_2, window_bounds = array<i64: 1, 32>}, {transform_indices = @transform_3, window_bounds = array<i64: 16, 32>}]} {
    %c0 = arith.constant 0 : index
    %c0_0 = arith.constant 0 : index
    %0 = vector.load %arg1[%c0, %c0_0] : memref<16x32xbf16, #tpu.memory_space<vmem>>, vector<16x32xbf16>
    %c0_1 = arith.constant 0 : index
    %c0_2 = arith.constant 0 : index
    %1 = vector.load %arg2[%c0_1, %c0_2] : memref<32x32xbf16, #tpu.memory_space<vmem>>, vector<32x32xbf16>
    %cst = arith.constant dense<0.000000e+00> : vector<16x32xf32>
    %2 = tpu.matmul %0, %1, %cst {dimension_numbers = #tpu.dot_dimension_numbers<[1], [0], [0], [1], [0, 0, 1, 1], [], []>} : vector<16x32xbf16>, vector<32x32xbf16>, vector<16x32xf32> -> vector<16x32xf32>
    %c0_3 = arith.constant 0 : index
    %c0_4 = arith.constant 0 : index
    %3 = vector.load %arg3[%c0_3, %c0_4] : memref<1x32xf32, #tpu.memory_space<vmem>>, vector<1x32xf32>
    %4 = vector.broadcast %3 : vector<1x32xf32> to vector<16x32xf32>
    %5 = arith.addf %2, %4 : vector<16x32xf32>
    %c0_5 = arith.constant 0 : index
    %c0_6 = arith.constant 0 : index
    %6 = vector.load %arg4[%c0_5, %c0_6] : memref<16x32xf32, #tpu.memory_space<vmem>>, vector<16x32xf32>
    tpu.vector_store %arg4[%c0_5, %c0_6], %5 {strides = array<i32>} : memref<16x32xf32, #tpu.memory_space<vmem>>, vector<16x32xf32>,
    return
  }
  func.func @transform_0(%arg0: i32) -> (i32, i32) {
    %c0_i32 = arith.constant 0 : i32
    %c0_i32_0 = arith.constant 0 : i32
    return %arg0, %c0_i32 : i32, i32
  }
  func.func @transform_1(%arg0: i32) -> (i32, i32) {
    %c0_i32 = arith.constant 0 : i32
    %c0_i32_0 = arith.constant 0 : i32
    %c0_i32_1 = arith.constant 0 : i32
    return %c0_i32, %c0_i32_0 : i32, i32
  }
  func.func @transform_2(%arg0: i32) -> (i32, i32) {
    %c0_i32 = arith.constant 0 : i32
    %c0_i32_0 = arith.constant 0 : i32
    %c0_i32_1 = arith.constant 0 : i32
    return %c0_i32, %c0_i32_0 : i32, i32
  }
  func.func @transform_3(%arg0: i32) -> (i32, i32) {
    %c0_i32 = arith.constant 0 : i32
    %c0_i32_0 = arith.constant 0 : i32
    return %arg0, %c0_i32 : i32, i32
  }
}

</mosaic_0001>

<llo_original>
// kernel: multi_head_attention.5
$region0: #{multi_head_attention.5}
  #allocation0 [shape = 'u32[]', space=smem, size = 0x4, offset = 0x4, fixed_abs, tag = 'smem constant byte address 0x4 - core index']
  #allocation1 [shape = 'u32[144,128]{1,0:T(1,128)}', space=vmem, size = 0x12000, scoped, tag = 'internal scratch']
  %s0 = inlined_call_operand.vmem [shape: bf16[16,32], index: 0, kind: input, shape index: {}]
  %s1 = inlined_call_operand.vmem [shape: bf16[32,32], index: 1, kind: input, shape index: {}]
  %s2 = inlined_call_operand.vmem [shape: f32[1,32], index: 2, kind: input, shape index: {}]
  %s3 = inlined_call_operand.vmem [shape: bf16[16,32], index: 3, kind: output, shape index: {}]
  %s4 = sld [smem:[#allocation0]]
  $region22: #{multi_head_attention.5} parent=0
    _
  %s6 = ssub.s32 1, %s4
  %s7 = scalar_select 0, %s6, %s4
  // Predicated region
  $region2: #{multi_head_attention.5} parent=0 // pred_check
    _
  $region3: #{multi_head_attention.5} parent=0 // pred_check_branch
    %9 = sbr.rel (0) target = $region5
  $region4: #{multi_head_attention.5} parent=0 // pred_region
    _
  $region5: #{multi_head_attention.5} parent=0 // pred_fallthru
    _
  // Predicated region
  $region6: #{multi_head_attention.5} parent=0 // pred_check
    _
  $region7: #{multi_head_attention.5} parent=0 // pred_check_branch
    %11 = sbr.rel (0) target = $region9
  $region8: #{multi_head_attention.5} parent=0 // pred_region
    _
  $region9: #{multi_head_attention.5} parent=0 // pred_fallthru
    _
  // Predicated region
  $region10: #{multi_head_attention.5} parent=0 // pred_check
    _
  $region11: #{multi_head_attention.5} parent=0 // pred_check_branch
    %13 = sbr.rel (0) target = $region13
  $region12: #{multi_head_attention.5} parent=0 // pred_region
    _
  $region13: #{multi_head_attention.5} parent=0 // pred_fallthru
    _
  %v15 = vld [vmem:[%s0] sm:$0xf]
  %v16 = vld [vmem:[%s0 + $0x4] sm:$0xf]
  %v17 = vld [vmem:[%s1] sm:$0xf]
  %v18 = vld [vmem:[%s1 + $0x4] sm:$0xf]
  %v19 = vld [vmem:[%s1 + $0x8] sm:$0xf]
  %v20 = vld [vmem:[%s1 + $0xc] sm:$0xf]
  %v21 = vld [vmem:[%s2] sm:$0x1]
  %v23 = vlaneseq
  %v24 = vshrl.u32 %v23, 7
  %v25 = vsub.s32 0, %v24
  %v26 = vrot.slane %v21, %v25
  %v30 = vunpack.c.l.b16 %v15
  %v31 = vunpack.c.l.b16 %v16
  %v32 = vpack.c.b16 %v31, %v30
  %v37 = vunpack.c.l.b16 %v17
  %v38 = vunpack.c.l.b16 %v18
  %v39 = vunpack.c.l.b16 %v19
  %v40 = vunpack.c.l.b16 %v20
  %v41 = vpack.c.b16 %v38, %v37
  %v42 = vpack.c.b16 %v40, %v39
  %vm45 = vcmask 261120
  %v47 = vsel %vm45, %v32, 0
  %49 = vmatprep.subr.bf16.mxu0 0
  %50 = vmatpush1.bf16.msra.mxu0 %v41
  %51 = vmatprep.subr.bf16.mxu0 0
  %52 = vmatpush1.bf16.msra.mxu0 %v42
  %53 = vmatprep.subr.bf16.mxu0 0
  %54 = vmatpush1.bf16.msra.mxu0 0
  %55 = vmatprep.subr.bf16.mxu0 0
  %56 = vmatpush1.bf16.msra.mxu0 0
  %57 = vmatprep.subr.bf16.mxu0 0
  %58 = vmatpush1.bf16.msra.mxu0 0
  %59 = vmatprep.subr.bf16.mxu0 0
  %60 = vmatpush1.bf16.msra.mxu0 0
  %61 = vmatprep.subr.bf16.mxu0 0
  %62 = vmatpush1.bf16.msra.mxu0 0
  %63 = vmatprep.subr.bf16.mxu0 0
  %64 = vmatpush1.bf16.msra.mxu0 0
  %65 = vmatprep.subr.bf16.mxu0 0
  %66 = vmatpush1.bf16.msra.mxu0 0
  %67 = vmatprep.subr.bf16.mxu0 0
  %68 = vmatpush1.bf16.msra.mxu0 0
  %69 = vmatprep.subr.bf16.mxu0 0
  %70 = vmatpush1.bf16.msra.mxu0 0
  %71 = vmatprep.subr.bf16.mxu0 0
  %72 = vmatpush1.bf16.msra.mxu0 0
  %73 = vmatprep.subr.bf16.mxu0 0
  %74 = vmatpush1.bf16.msra.mxu0 0
  %75 = vmatprep.subr.bf16.mxu0 0
  %76 = vmatpush1.bf16.msra.mxu0 0
  %77 = vmatprep.subr.bf16.mxu0 0
  %78 = vmatpush1.bf16.msra.mxu0 0
  %79 = vmatprep.subr.bf16.mxu0 0
  %80 = vmatpush1.bf16.msra.mxu0 0
  %81 = vmatprep.mubr.bf16.mxu0 0
  %82 = vmatmul.mubr.bf16.gmra.mrb[0].mxu0 %v47
  %v83 = vpop.f32.mrb[0].mxu0
  %v84 = vadd.f32 %v26, %v83
  %v85 = vpop.f32.mrb[0].mxu0
  %v86 = vpop.f32.mrb[0].mxu0
  %v87 = vadd.f32 %v26, %v86
  %v88 = vpop.f32.mrb[0].mxu0
  %89 = vdwg.mxu0
  %v90 = vpack.c.bf16 %v87, %v84
  %v92 = vunpack.c.l.b16 %v90
  %v93 = vunpack.c.h.b16 %v90
  %v94 = vpack.c.b16 %v92, %v92
  %v95 = vpack.c.b16 %v93, %v93
  %vm98 = vcmask 257024
  %99 = vst.msk [vmem:[%s3] sm:$0xf] %vm98, %v94
  %100 = vst.msk [vmem:[%s3 + $0x4] sm:$0xf] %vm98, %v95
  // Predicated region
  $region14: #{multi_head_attention.5} parent=0 // pred_check
    _
  $region15: #{multi_head_attention.5} parent=0 // pred_check_branch
    %102 = sbr.rel (0) target = $region17
  $region16: #{multi_head_attention.5} parent=0 // pred_region
    _
  $region17: #{multi_head_attention.5} parent=0 // pred_fallthru
    _
  // Predicated region
  $region18: #{multi_head_attention.5} parent=0 // pred_check
    _
  $region19: #{multi_head_attention.5} parent=0 // pred_check_branch
    %104 = sbr.rel (0) target = $region21
  $region20: #{multi_head_attention.5} parent=0 // pred_region
    _
  $region21: #{multi_head_attention.5} parent=0 // pred_fallthru
    _

// kernel: multi_head_attention.9
$region0: #{multi_head_attention.9}
  #allocation0 [shape = 'u32[]', space=smem, size = 0x4, offset = 0x4, fixed_abs, tag = 'smem constant byte address 0x4 - core index']
  #allocation1 [shape = 'u32[144,128]{1,0:T(1,128)}', space=vmem, size = 0x12000, scoped, tag = 'internal scratch']
  %s0 = inlined_call_operand.vmem [shape: bf16[16,32], index: 0, kind: input, shape index: {}]
  %s1 = inlined_call_operand.vmem [shape: bf16[32,32], index: 1, kind: input, shape index: {}]
  %s2 = inlined_call_operand.vmem [shape: f32[1,32], index: 2, kind: input, shape index: {}]
  %s3 = inlined_call_operand.hbm [shape: f32[16,32], index: 3, kind: output, shape index: {}]
  %s4 = sld [smem:[#allocation0]]
  $region22: #{multi_head_attention.9} parent=0
    _
  %s6 = ssub.s32 1, %s4
  %s7 = scalar_select 0, %s6, %s4
  $region1: #{multi_head_attention.9} parent=0
    #allocation2 [shape = 'u8[8192]{0}', space=vmem, size = 0x2000, scoped, tag = 'output window, operand 0, single buffered']
    #allocation3 [shape = 's32[1]{0}', space=sflag, size = 0x4, scoped, tag = 'scoped memory for multi_head_attention.9']
    %8 = vsyncpa [#allocation3], 0
    // Predicated region
    $region2: #{multi_head_attention.9} parent=1 // pred_check
      _
    $region3: #{multi_head_attention.9} parent=1 // pred_check_branch
      %10 = sbr.rel (0) target = $region5
    $region4: #{multi_head_attention.9} parent=1 // pred_region
      _
    $region5: #{multi_head_attention.9} parent=1 // pred_fallthru
      _
    // Predicated region
    $region6: #{multi_head_attention.9} parent=1 // pred_check
      _
    $region7: #{multi_head_attention.9} parent=1 // pred_check_branch
      %12 = sbr.rel (0) target = $region9
    $region8: #{multi_head_attention.9} parent=1 // pred_region
      _
    $region9: #{multi_head_attention.9} parent=1 // pred_fallthru
      _
    // Predicated region
    $region10: #{multi_head_attention.9} parent=1 // pred_check
      _
    $region11: #{multi_head_attention.9} parent=1 // pred_check_branch
      %14 = sbr.rel (0) target = $region13
    $region12: #{multi_head_attention.9} parent=1 // pred_region
      _
    $region13: #{multi_head_attention.9} parent=1 // pred_fallthru
      _
    %v16 = vld [vmem:[%s0] sm:$0xf]
    %v17 = vld [vmem:[%s0 + $0x4] sm:$0xf]
    %v18 = vld [vmem:[%s1] sm:$0xf]
    %v19 = vld [vmem:[%s1 + $0x4] sm:$0xf]
    %v20 = vld [vmem:[%s1 + $0x8] sm:$0xf]
    %v21 = vld [vmem:[%s1 + $0xc] sm:$0xf]
    %v22 = vld [vmem:[%s2] sm:$0x1]
    %v24 = vlaneseq
    %v25 = vshrl.u32 %v24, 7
    %v26 = vsub.s32 0, %v25
    %v27 = vrot.slane %v22, %v26
    %v31 = vunpack.c.l.b16 %v16
    %v32 = vunpack.c.l.b16 %v17
    %v33 = vpack.c.b16 %v32, %v31
    %v38 = vunpack.c.l.b16 %v18
    %v39 = vunpack.c.l.b16 %v19
    %v40 = vunpack.c.l.b16 %v20
    %v41 = vunpack.c.l.b16 %v21
    %v42 = vpack.c.b16 %v39, %v38
    %v43 = vpack.c.b16 %v41, %v40
    %vm46 = vcmask 261120
    %v48 = vsel %vm46, %v33, 0
    %50 = vmatprep.subr.bf16.mxu0 0
    %51 = vmatpush1.bf16.msra.mxu0 %v42
    %52 = vmatprep.subr.bf16.mxu0 0
    %53 = vmatpush1.bf16.msra.mxu0 %v43
    %54 = vmatprep.subr.bf16.mxu0 0
    %55 = vmatpush1.bf16.msra.mxu0 0
    %56 = vmatprep.subr.bf16.mxu0 0
    %57 = vmatpush1.bf16.msra.mxu0 0
    %58 = vmatprep.subr.bf16.mxu0 0
    %59 = vmatpush1.bf16.msra.mxu0 0
    %60 = vmatprep.subr.bf16.mxu0 0
    %61 = vmatpush1.bf16.msra.mxu0 0
    %62 = vmatprep.subr.bf16.mxu0 0
    %63 = vmatpush1.bf16.msra.mxu0 0
    %64 = vmatprep.subr.bf16.mxu0 0
    %65 = vmatpush1.bf16.msra.mxu0 0
    %66 = vmatprep.subr.bf16.mxu0 0
    %67 = vmatpush1.bf16.msra.mxu0 0
    %68 = vmatprep.subr.bf16.mxu0 0
    %69 = vmatpush1.bf16.msra.mxu0 0
    %70 = vmatprep.subr.bf16.mxu0 0
    %71 = vmatpush1.bf16.msra.mxu0 0
    %72 = vmatprep.subr.bf16.mxu0 0
    %73 = vmatpush1.bf16.msra.mxu0 0
    %74 = vmatprep.subr.bf16.mxu0 0
    %75 = vmatpush1.bf16.msra.mxu0 0
    %76 = vmatprep.subr.bf16.mxu0 0
    %77 = vmatpush1.bf16.msra.mxu0 0
    %78 = vmatprep.subr.bf16.mxu0 0
    %79 = vmatpush1.bf16.msra.mxu0 0
    %80 = vmatprep.subr.bf16.mxu0 0
    %81 = vmatpush1.bf16.msra.mxu0 0
    %82 = vmatprep.mubr.bf16.mxu0 0
    %83 = vmatmul.mubr.bf16.gmra.mrb[0].mxu0 %v48
    %v84 = vpop.f32.mrb[0].mxu0
    %v85 = vadd.f32 %v27, %v84
    %v86 = vpop.f32.mrb[0].mxu0
    %v87 = vpop.f32.mrb[0].mxu0
    %v88 = vadd.f32 %v27, %v87
    %v89 = vpop.f32.mrb[0].mxu0
    %90 = vdwg.mxu0
    %91 = vst.msk [vmem:[#allocation2] sm:$0xff] %vm46, %v85
    %92 = vst.msk [vmem:[#allocation2 + $0x8] sm:$0xff] %vm46, %v88
    // Predicated region
    $region14: #{multi_head_attention.9} parent=1 // pred_check
      _
    $region15: #{multi_head_attention.9} parent=1 // pred_check_branch
      %94 = sbr.rel (0) target = $region17
    $region16: #{multi_head_attention.9} parent=1 // pred_region
      %s96 = ssub.s32 256, 256
      %97 = vsyncadd [#allocation3], %s96
      %s98 = sshll.u32 [#allocation2], 4
      %s99 = int_to_ptr.vmem [resolvable:$true] %s98
      %104 = dma.vmem_to_hbm [thread:$0]  %s99, 256, %s3, [#allocation3], 128, 128, 8
    $region17: #{multi_head_attention.9} parent=1 // pred_fallthru
      _
    // Predicated region
    $region18: #{multi_head_attention.9} parent=1 // pred_check
      _
    $region19: #{multi_head_attention.9} parent=1 // pred_check_branch
      %106 = sbr.rel (0) target = $region21
    $region20: #{multi_head_attention.9} parent=1 // pred_region
      %107 = dma.done [#allocation3], 256
    $region21: #{multi_head_attention.9} parent=1 // pred_fallthru
      _
    %108 = vsyncpa [#allocation3], 1

// kernel: multi_head_attention.8
$region0: #{multi_head_attention.8}
  #allocation0 [shape = 'u32[]', space=smem, size = 0x4, offset = 0x4, fixed_abs, tag = 'smem constant byte address 0x4 - core index']
  #allocation1 [shape = 'u32[144,128]{1,0:T(1,128)}', space=vmem, size = 0x12000, scoped, tag = 'internal scratch']
  %s0 = inlined_call_operand.vmem [shape: bf16[2,8,32], index: 0, kind: input, shape index: {}]
  %s1 = inlined_call_operand.vmem [shape: bf16[2,8,32], index: 1, kind: input, shape index: {}]
  %s2 = inlined_call_operand.vmem [shape: bf16[2,8,32], index: 2, kind: input, shape index: {}]
  %s3 = inlined_call_operand.vmem [shape: bf16[2,8,8], index: 3, kind: input, shape index: {}]
  %s4 = inlined_call_operand.vmem [shape: bf16[2,8,32], index: 4, kind: output, shape index: {}]
  %s5 = sld [smem:[#allocation0]]
  $region49: #{multi_head_attention.8} parent=0
    _
  %s7 = ssub.s32 1, %s5
  %s8 = scalar_select 0, %s7, %s5
  loop: start=0, step=1, limit=4
  $region2: #{multi_head_attention.8} parent=0 // loop_pre_header
    _
  $region3: #{multi_head_attention.8} parent=0 // loop_header
    %s10 = sphi 0, %s14
    %p11 = scmp.ge.s32.totalorder %s10, 4
    %s17 = sphi 0, %s29
    %s18 = sphi 0, %s25
    %s19 = sphi 0, %s17
    %s20 = sphi 0, %s18
    %s21 = sphi 0, %s19
    %s22 = sphi 0, %s20
    %s34 = sphi 0, %s36
    %s37 = sphi 0, %s34
    %s38 = sphi 0, %s37
    %s54 = sphi 0, %s38
    %s60 = sphi 0, %s62
    %s63 = sphi 0, %s60
    %s64 = sphi 0, %s63
    %s80 = sphi 0, %s64
    %s86 = sphi 0, %s88
    %s89 = sphi 0, %s86
    %s90 = sphi 0, %s89
    %s106 = sphi 0, %s90
    %s114 = sphi 0, %s116
    %s117 = sphi 0, %s114
    %s118 = sphi 0, %s117
    %s134 = sphi 0, %s118
    %s142 = sphi 0, %s144
    %s145 = sphi 0, %s142
    %s146 = sphi 0, %s145
    %s162 = sphi 0, %s146
  $region4: #{multi_head_attention.8} parent=0 // loop_header_branch
    %13 = sbr.rel (%p11) target = $region8
  $region5: #{multi_head_attention.8} parent=0 // loop_body
    %s15 = ssub.s32 %s10, 1
    %s16 = ssub.s32 %s10, 2
    %s23 = sadd.s32 1, %s18
    %p24 = scmp.ge.s32.totalorder %s23, 1
    %s25 = scalar_select %p24, 0, %s23
    %s26 = sadd.s32 1, %s17
    %s27 = scalar_select %p24, %s26, %s17
    %p28 = scmp.ge.s32.totalorder %s27, 2
    %s29 = scalar_select %p28, 0, %s27
    %s30 = ssub.s32 %s17, %s29
    %s31 = ssub.s32 %s18, %s25
    %s32 = sor.u32 %s30, %s31
    %p33 = scmp.eq.s32.totalorder %s32, 0
    %s35 = sadd.s32 %s34, 1
    %s36 = scalar_select %p33, %s34, %s35
    %p39 = pneg %p33
    %p40 = scmp.eq.s32.totalorder %s10, 1
    %p41 = por %p39, %p40
    %p42 = scmp.ne.s32.totalorder %s34, %s37
    %p43 = scmp.eq.s32.totalorder %s10, 0
    %p44 = por %p42, %p43
    %p45 = scmp.ne.s32.totalorder %s34, %s37
    %p46 = scmp.eq.s32.totalorder %s15, 1
    %p47 = por %p45, %p46
    %p48 = scmp.ne.s32.totalorder %s37, %s38
    %p49 = scmp.eq.s32.totalorder %s15, 0
    %p50 = por %p48, %p49
    %p51 = scmp.ne.s32.totalorder %s37, %s38
    %p52 = scmp.eq.s32.totalorder %s16, 1
    %p53 = por %p51, %p52
    %p55 = scmp.ne.s32.totalorder %s38, %s54
    %p56 = scmp.eq.s32.totalorder %s16, 0
    %p57 = por %p55, %p56
    %s58 = ssub.s32 %s17, %s29
    %p59 = scmp.eq.s32.totalorder %s58, 0
    %s61 = sadd.s32 %s60, 1
    %s62 = scalar_select %p59, %s60, %s61
    %p65 = pneg %p59
    %p66 = scmp.eq.s32.totalorder %s10, 1
    %p67 = por %p65, %p66
    %p68 = scmp.ne.s32.totalorder %s60, %s63
    %p69 = scmp.eq.s32.totalorder %s10, 0
    %p70 = por %p68, %p69
    %p71 = scmp.ne.s32.totalorder %s60, %s63
    %p72 = scmp.eq.s32.totalorder %s15, 1
    %p73 = por %p71, %p72
    %p74 = scmp.ne.s32.totalorder %s63, %s64
    %p75 = scmp.eq.s32.totalorder %s15, 0
    %p76 = por %p74, %p75
    %p77 = scmp.ne.s32.totalorder %s63, %s64
    %p78 = scmp.eq.s32.totalorder %s16, 1
    %p79 = por %p77, %p78
    %p81 = scmp.ne.s32.totalorder %s64, %s80
    %p82 = scmp.eq.s32.totalorder %s16, 0
    %p83 = por %p81, %p82
    %s84 = ssub.s32 %s17, %s29
    %p85 = scmp.eq.s32.totalorder %s84, 0
    %s87 = sadd.s32 %s86, 1
    %s88 = scalar_select %p85, %s86, %s87
    %p91 = pneg %p85
    %p92 = scmp.eq.s32.totalorder %s10, 1
    %p93 = por %p91, %p92
    %p94 = scmp.ne.s32.totalorder %s86, %s89
    %p95 = scmp.eq.s32.totalorder %s10, 0
    %p96 = por %p94, %p95
    %p97 = scmp.ne.s32.totalorder %s86, %s89
    %p98 = scmp.eq.s32.totalorder %s15, 1
    %p99 = por %p97, %p98
    %p100 = scmp.ne.s32.totalorder %s89, %s90
    %p101 = scmp.eq.s32.totalorder %s15, 0
    %p102 = por %p100, %p101
    %p103 = scmp.ne.s32.totalorder %s89, %s90
    %p104 = scmp.eq.s32.totalorder %s16, 1
    %p105 = por %p103, %p104
    %p107 = scmp.ne.s32.totalorder %s90, %s106
    %p108 = scmp.eq.s32.totalorder %s16, 0
    %p109 = por %p107, %p108
    %s110 = ssub.s32 %s17, %s29
    %s111 = ssub.s32 %s18, %s25
    %s112 = sor.u32 %s110, %s111
    %p113 = scmp.eq.s32.totalorder %s112, 0
    %s115 = sadd.s32 %s114, 1
    %s116 = scalar_select %p113, %s114, %s115
    %p119 = pneg %p113
    %p120 = scmp.eq.s32.totalorder %s10, 1
    %p121 = por %p119, %p120
    %p122 = scmp.ne.s32.totalorder %s114, %s117
    %p123 = scmp.eq.s32.totalorder %s10, 0
    %p124 = por %p122, %p123
    %p125 = scmp.ne.s32.totalorder %s114, %s117
    %p126 = scmp.eq.s32.totalorder %s15, 1
    %p127 = por %p125, %p126
    %p128 = scmp.ne.s32.totalorder %s117, %s118
    %p129 = scmp.eq.s32.totalorder %s15, 0
    %p130 = por %p128, %p129
    %p131 = scmp.ne.s32.totalorder %s117, %s118
    %p132 = scmp.eq.s32.totalorder %s16, 1
    %p133 = por %p131, %p132
    %p135 = scmp.ne.s32.totalorder %s118, %s134
    %p136 = scmp.eq.s32.totalorder %s16, 0
    %p137 = por %p135, %p136
    %s138 = ssub.s32 %s17, %s29
    %s139 = ssub.s32 %s18, %s25
    %s140 = sor.u32 %s138, %s139
    %p141 = scmp.eq.s32.totalorder %s140, 0
    %s143 = sadd.s32 %s142, 1
    %s144 = scalar_select %p141, %s142, %s143
    %p147 = pneg %p141
    %p148 = scmp.eq.s32.totalorder %s10, 1
    %p149 = por %p147, %p148
    %p150 = scmp.ne.s32.totalorder %s142, %s145
    %p151 = scmp.eq.s32.totalorder %s10, 0
    %p152 = por %p150, %p151
    %p153 = scmp.ne.s32.totalorder %s142, %s145
    %p154 = scmp.eq.s32.totalorder %s15, 1
    %p155 = por %p153, %p154
    %p156 = scmp.ne.s32.totalorder %s145, %s146
    %p157 = scmp.eq.s32.totalorder %s15, 0
    %p158 = por %p156, %p157
    %p159 = scmp.ne.s32.totalorder %s145, %s146
    %p160 = scmp.eq.s32.totalorder %s16, 1
    %p161 = por %p159, %p160
    %p163 = scmp.ne.s32.totalorder %s146, %s162
    %p164 = scmp.eq.s32.totalorder %s16, 0
    %p165 = por %p163, %p164
    %p166 = scmp.le.s32.totalorder 1, %s10
    %p167 = scmp.lt.s32.totalorder %s10, 3
    %p168 = pnand %p166, %p167
    %p169 = pneg %p168
    // Predicated region
    $region9: #{multi_head_attention.8} parent=5 // pred_check
      _
    $region10: #{multi_head_attention.8} parent=5 // pred_check_branch
      %171 = sbr.rel (%p168) target = $region12
    $region11: #{multi_head_attention.8} parent=5 // pred_region
      %s172 = ssub.s32 %s10, 1
    $region12: #{multi_head_attention.8} parent=5 // pred_fallthru
      _
    %p173 = scmp.lt.s32.totalorder %s10, 2
    // Predicated region
    $region13: #{multi_head_attention.8} parent=5 // pred_check
      %p174 = pneg %p173
    $region14: #{multi_head_attention.8} parent=5 // pred_check_branch
      %176 = sbr.rel (%p174) target = $region16
    $region15: #{multi_head_attention.8} parent=5 // pred_region
      // Predicated region
      $region17: #{multi_head_attention.8} parent=15 // pred_check
        %p177 = pneg %p44
      $region18: #{multi_head_attention.8} parent=15 // pred_check_branch
        %179 = sbr.rel (%p177) target = $region20
      $region19: #{multi_head_attention.8} parent=15 // pred_region
        %p180 = scmp.lt.s32.totalorder %s17, 1
        %s181 = scalar_select %p180, %s17, 1
        %p182 = scmp.lt.s32.totalorder %s18, 0
        %s183 = scalar_select %p182, %s18, 0
        %s184 = sadd.s32 %s183, %s181
        %s185 = smul.addr %s184, 4
        %s186 = scalar_lea.vmem %s0, %s185
      $region20: #{multi_head_attention.8} parent=15 // pred_fallthru
        _
      // Predicated region
      $region21: #{multi_head_attention.8} parent=15 // pred_check
        %p187 = pneg %p70
      $region22: #{multi_head_attention.8} parent=15 // pred_check_branch
        %189 = sbr.rel (%p187) target = $region24
      $region23: #{multi_head_attention.8} parent=15 // pred_region
        %p190 = scmp.lt.s32.totalorder %s17, 1
        %s191 = scalar_select %p190, %s17, 1
        %s192 = smul.addr %s191, 4
        %s193 = scalar_lea.vmem %s1, %s192
      $region24: #{multi_head_attention.8} parent=15 // pred_fallthru
        _
      // Predicated region
      $region25: #{multi_head_attention.8} parent=15 // pred_check
        %p194 = pneg %p96
      $region26: #{multi_head_attention.8} parent=15 // pred_check_branch
        %196 = sbr.rel (%p194) target = $region28
      $region27: #{multi_head_attention.8} parent=15 // pred_region
        %p197 = scmp.lt.s32.totalorder %s17, 1
        %s198 = scalar_select %p197, %s17, 1
        %s199 = smul.addr %s198, 4
        %s200 = scalar_lea.vmem %s2, %s199
      $region28: #{multi_head_attention.8} parent=15 // pred_fallthru
        _
      // Predicated region
      $region29: #{multi_head_attention.8} parent=15 // pred_check
        %p201 = pneg %p124
      $region30: #{multi_head_attention.8} parent=15 // pred_check_branch
        %203 = sbr.rel (%p201) target = $region32
      $region31: #{multi_head_attention.8} parent=15 // pred_region
        %p204 = scmp.lt.s32.totalorder %s17, 1
        %s205 = scalar_select %p204, %s17, 1
        %p206 = scmp.lt.s32.totalorder %s18, 0
        %s207 = scalar_select %p206, %s18, 0
        %s208 = sadd.s32 %s207, %s205
        %s209 = smul.addr %s208, 4
        %s210 = scalar_lea.vmem %s3, %s209
      $region32: #{multi_head_attention.8} parent=15 // pred_fallthru
        _
    $region16: #{multi_head_attention.8} parent=5 // pred_fallthru
      _
    %p211 = scmp.le.s32.totalorder 1, %s10
    %p212 = scmp.lt.s32.totalorder %s10, 3
    %p213 = pnand %p211, %p212
    %p214 = pneg %p213
    // Predicated region
    $region33: #{multi_head_attention.8} parent=5 // pred_check
      _
    $region34: #{multi_head_attention.8} parent=5 // pred_check_branch
      %216 = sbr.rel (%p213) target = $region36
    $region35: #{multi_head_attention.8} parent=5 // pred_region
      %s217 = ssub.s32 %s10, 1
      %p218 = scmp.lt.s32.totalorder %s19, 1
      %s219 = scalar_select %p218, %s19, 1
      %p220 = scmp.lt.s32.totalorder %s20, 0
      %s221 = scalar_select %p220, %s20, 0
      %s222 = sadd.s32 %s221, %s219
      %s223 = smul.addr %s222, 4
      %s224 = scalar_lea.vmem %s0, %s223
      %p225 = pneg %p50
      %p226 = pneg %p47
      %p227 = scmp.lt.s32.totalorder %s19, 1
      %s228 = scalar_select %p227, %s19, 1
      %s229 = smul.addr %s228, 4
      %s230 = scalar_lea.vmem %s1, %s229
      %p231 = pneg %p76
      %p232 = pneg %p73
      %p233 = scmp.lt.s32.totalorder %s19, 1
      %s234 = scalar_select %p233, %s19, 1
      %s235 = smul.addr %s234, 4
      %s236 = scalar_lea.vmem %s2, %s235
      %p237 = pneg %p102
      %p238 = pneg %p99
      %p239 = scmp.lt.s32.totalorder %s19, 1
      %s240 = scalar_select %p239, %s19, 1
      %p241 = scmp.lt.s32.totalorder %s20, 0
      %s242 = scalar_select %p241, %s20, 0
      %s243 = sadd.s32 %s242, %s240
      %s244 = smul.addr %s243, 4
      %s245 = scalar_lea.vmem %s3, %s244
      %p246 = pneg %p130
      %p247 = pneg %p127
      %p248 = pneg %p158
      %p249 = pneg %p155
      %p250 = scmp.lt.s32.totalorder %s19, 1
      %s251 = scalar_select %p250, %s19, 1
      %p252 = scmp.lt.s32.totalorder %s20, 0
      %s253 = scalar_select %p252, %s20, 0
      %s254 = sadd.s32 %s253, %s251
      %s255 = smul.addr %s254, 4
      %s256 = scalar_lea.vmem %s4, %s255
      %p257 = scmp.lt.s32.totalorder %s19, 1
      %s258 = scalar_select %p257, %s19, 1
      %p259 = scmp.lt.s32.totalorder %s20, 0
      %s260 = scalar_select %p259, %s20, 0
      %s261 = sadd.s32 %s260, %s258
      %s262 = smul.addr %s261, 4
      %s263 = scalar_lea.vmem %s0, %s262
      %p264 = scmp.lt.s32.totalorder %s19, 1
      %s265 = scalar_select %p264, %s19, 1
      %s266 = smul.addr %s265, 4
      %s267 = scalar_lea.vmem %s1, %s266
      %p268 = scmp.lt.s32.totalorder %s19, 1
      %s269 = scalar_select %p268, %s19, 1
      %s270 = smul.addr %s269, 4
      %s271 = scalar_lea.vmem %s2, %s270
      %p272 = scmp.lt.s32.totalorder %s19, 1
      %s273 = scalar_select %p272, %s19, 1
      %p274 = scmp.lt.s32.totalorder %s20, 0
      %s275 = scalar_select %p274, %s20, 0
      %s276 = sadd.s32 %s275, %s273
      %s277 = smul.addr %s276, 4
      %s278 = scalar_lea.vmem %s3, %s277
      %p279 = scmp.lt.s32.totalorder %s19, 1
      %s280 = scalar_select %p279, %s19, 1
      %p281 = scmp.lt.s32.totalorder %s20, 0
      %s282 = scalar_select %p281, %s20, 0
      %s283 = sadd.s32 %s282, %s280
      %s284 = smul.addr %s283, 4
      %s285 = scalar_lea.vmem %s4, %s284
      %v287 = vld [vmem:[%s263] sm:$0xf]
      %v288 = vld [vmem:[%s267] sm:$0xf]
      %v289 = vld [vmem:[%s271] sm:$0xf]
      %v290 = vld [vmem:[%s278] sm:$0xf]
      %v291 = vunpack.c.l.bf16 %v290
      %vm292 = vcmp.gt.f32.partialorder %v291, 0.5
      %vm293 = vcmask 64512
      %v295 = vsel %vm293, %v287, 0
      %v298 = vsel %vm293, %v288, 0
      %300 = vmatprep.subr.bf16.mxu0 0
      %301 = vmatpush1.bf16.xpose.msra.mxu0 %v298
      %302 = vmatprep.subr.bf16.mxu0 0
      %303 = vmatpush1.bf16.xpose.msra.mxu0 0
      %304 = vmatprep.subr.bf16.mxu0 0
      %305 = vmatpush1.bf16.xpose.msra.mxu0 0
      %306 = vmatprep.subr.bf16.mxu0 0
      %307 = vmatpush1.bf16.xpose.msra.mxu0 0
      %308 = vmatprep.subr.bf16.mxu0 0
      %309 = vmatpush1.bf16.xpose.msra.mxu0 0
      %310 = vmatprep.subr.bf16.mxu0 0
      %311 = vmatpush1.bf16.xpose.msra.mxu0 0
      %312 = vmatprep.subr.bf16.mxu0 0
      %313 = vmatpush1.bf16.xpose.msra.mxu0 0
      %314 = vmatprep.subr.bf16.mxu0 0
      %315 = vmatpush1.bf16.xpose.msra.mxu0 0
      %316 = vmatprep.subr.bf16.mxu0 0
      %317 = vmatpush1.bf16.xpose.msra.mxu0 0
      %318 = vmatprep.subr.bf16.mxu0 0
      %319 = vmatpush1.bf16.xpose.msra.mxu0 0
      %320 = vmatprep.subr.bf16.mxu0 0
      %321 = vmatpush1.bf16.xpose.msra.mxu0 0
      %322 = vmatprep.subr.bf16.mxu0 0
      %323 = vmatpush1.bf16.xpose.msra.mxu0 0
      %324 = vmatprep.subr.bf16.mxu0 0
      %325 = vmatpush1.bf16.xpose.msra.mxu0 0
      %326 = vmatprep.subr.bf16.mxu0 0
      %327 = vmatpush1.bf16.xpose.msra.mxu0 0
      %328 = vmatprep.subr.bf16.mxu0 0
      %329 = vmatpush1.bf16.xpose.msra.mxu0 0
      %330 = vmatprep.subr.bf16.mxu0 0
      %331 = vmatpush1.bf16.xpose.msra.mxu0 0
      %332 = vmatprep.mubr.bf16.mxu0 0
      %333 = vmatmul.mubr.bf16.gmra.mrb[0].mxu0 %v295
      %v334 = vpop.f32.mrb[0].mxu0
      %v335 = vadd.f32 0.0, %v334
      %v336 = vpop.f32.mrb[0].mxu0
      %v337 = vpop.f32.mrb[0].mxu0
      %v338 = vpop.f32.mrb[0].mxu0
      %339 = vdwg.mxu0
      %v340 = vsel %vm292, -10000.0, %v335
      %v341 = vsel %vm293, %v340, -inf
      %342 = vmax.xlane.f32.xlu0 %v341
      %v343 = vpop.xlane.xlu0 %342
      %v344 = vsub.f32 %v340, %v343
      %v345 = vmul.f32 %v344, 1.442695
      %v346 = vpow.pop %v345
      %v347 = vsel %vm293, %v346, 0.0
      %348 = vadd.xlane.f32.xlu0 %v347
      %v349 = vpop.xlane.xlu0 %348
      %v350 = vrcp.pop %v349
      %v351 = vmul.f32 %v346, %v350
      %v352 = vpack.c.bf16 %v351, %v351
      %v354 = vsel %vm293, %v352, 0
      %vm356 = vcmask 1043456
      %v358 = vsel %vm356, %v289, 0
      %360 = vmatprep.subr.bf16.mxu0 0
      %361 = vmatpush1.bf16.msra.mxu0 %v358
      %362 = vmatprep.subr.bf16.mxu0 0
      %363 = vmatpush1.bf16.msra.mxu0 0
      %364 = vmatprep.subr.bf16.mxu0 0
      %365 = vmatpush1.bf16.msra.mxu0 0
      %366 = vmatprep.subr.bf16.mxu0 0
      %367 = vmatpush1.bf16.msra.mxu0 0
      %368 = vmatprep.subr.bf16.mxu0 0
      %369 = vmatpush1.bf16.msra.mxu0 0
      %370 = vmatprep.subr.bf16.mxu0 0
      %371 = vmatpush1.bf16.msra.mxu0 0
      %372 = vmatprep.subr.bf16.mxu0 0
      %373 = vmatpush1.bf16.msra.mxu0 0
      %374 = vmatprep.subr.bf16.mxu0 0
      %375 = vmatpush1.bf16.msra.mxu0 0
      %376 = vmatprep.subr.bf16.mxu0 0
      %377 = vmatpush1.bf16.msra.mxu0 0
      %378 = vmatprep.subr.bf16.mxu0 0
      %379 = vmatpush1.bf16.msra.mxu0 0
      %380 = vmatprep.subr.bf16.mxu0 0
      %381 = vmatpush1.bf16.msra.mxu0 0
      %382 = vmatprep.subr.bf16.mxu0 0
      %383 = vmatpush1.bf16.msra.mxu0 0
      %384 = vmatprep.subr.bf16.mxu0 0
      %385 = vmatpush1.bf16.msra.mxu0 0
      %386 = vmatprep.subr.bf16.mxu0 0
      %387 = vmatpush1.bf16.msra.mxu0 0
      %388 = vmatprep.subr.bf16.mxu0 0
      %389 = vmatpush1.bf16.msra.mxu0 0
      %390 = vmatprep.subr.bf16.mxu0 0
      %391 = vmatpush1.bf16.msra.mxu0 0
      %392 = vmatprep.mubr.bf16.mxu0 0
      %393 = vmatmul.mubr.bf16.gmra.mrb[0].mxu0 %v354
      %v394 = vpop.f32.mrb[0].mxu0
      %v395 = vadd.f32 0.0, %v394
      %v396 = vpop.f32.mrb[0].mxu0
      %v397 = vpop.f32.mrb[0].mxu0
      %v398 = vpop.f32.mrb[0].mxu0
      %399 = vdwg.mxu0
      %v400 = vpack.c.bf16 %v395, %v395
      %vm401 = vcmask 60416
      %402 = vst.msk [vmem:[%s285] sm:$0xf] %vm401, %v400
      %v404 = vunpack.c.l.b16 %v287
      %v405 = vpack.c.b16 %v404, %v404
      %406 = vrot.lane.b32.xlu0 %v405, 120
      %v407 = vpop.permute.xlu0 %406
      %v409 = vunpack.c.l.b16 %v288
      %v410 = vpack.c.b16 %v409, %v409
      %411 = vrot.lane.b32.xlu0 %v410, 120
      %v412 = vpop.permute.xlu0 %411
      %v414 = vsel %vm293, %v407, 0
      %v417 = vsel %vm293, %v412, 0
      %419 = vmatprep.subr.bf16.mxu0 0
      %420 = vmatpush1.bf16.xpose.msra.mxu0 %v417
      %421 = vmatprep.subr.bf16.mxu0 0
      %422 = vmatpush1.bf16.xpose.msra.mxu0 0
      %423 = vmatprep.subr.bf16.mxu0 0
      %424 = vmatpush1.bf16.xpose.msra.mxu0 0
      %425 = vmatprep.subr.bf16.mxu0 0
      %426 = vmatpush1.bf16.xpose.msra.mxu0 0
      %427 = vmatprep.subr.bf16.mxu0 0
      %428 = vmatpush1.bf16.xpose.msra.mxu0 0
      %429 = vmatprep.subr.bf16.mxu0 0
      %430 = vmatpush1.bf16.xpose.msra.mxu0 0
      %431 = vmatprep.subr.bf16.mxu0 0
      %432 = vmatpush1.bf16.xpose.msra.mxu0 0
      %433 = vmatprep.subr.bf16.mxu0 0
      %434 = vmatpush1.bf16.xpose.msra.mxu0 0
      %435 = vmatprep.subr.bf16.mxu0 0
      %436 = vmatpush1.bf16.xpose.msra.mxu0 0
      %437 = vmatprep.subr.bf16.mxu0 0
      %438 = vmatpush1.bf16.xpose.msra.mxu0 0
      %439 = vmatprep.subr.bf16.mxu0 0
      %440 = vmatpush1.bf16.xpose.msra.mxu0 0
      %441 = vmatprep.subr.bf16.mxu0 0
      %442 = vmatpush1.bf16.xpose.msra.mxu0 0
      %443 = vmatprep.subr.bf16.mxu0 0
      %444 = vmatpush1.bf16.xpose.msra.mxu0 0
      %445 = vmatprep.subr.bf16.mxu0 0
      %446 = vmatpush1.bf16.xpose.msra.mxu0 0
      %447 = vmatprep.subr.bf16.mxu0 0
      %448 = vmatpush1.bf16.xpose.msra.mxu0 0
      %449 = vmatprep.subr.bf16.mxu0 0
      %450 = vmatpush1.bf16.xpose.msra.mxu0 0
      %451 = vmatprep.mubr.bf16.mxu0 0
      %452 = vmatmul.mubr.bf16.gmra.mrb[0].mxu0 %v414
      %v453 = vpop.f32.mrb[0].mxu0
      %v454 = vadd.f32 0.0, %v453
      %v455 = vpop.f32.mrb[0].mxu0
      %v456 = vpop.f32.mrb[0].mxu0
      %v457 = vpop.f32.mrb[0].mxu0
      %458 = vdwg.mxu0
      %v459 = vsel %vm292, -10000.0, %v454
      %v460 = vsel %vm293, %v459, -inf
      %461 = vmax.xlane.f32.xlu0 %v460
      %v462 = vpop.xlane.xlu0 %461
      %v463 = vsub.f32 %v459, %v462
      %v464 = vmul.f32 %v463, 1.442695
      %v465 = vpow.pop %v464
      %v466 = vsel %vm293, %v465, 0.0
      %467 = vadd.xlane.f32.xlu0 %v466
      %v468 = vpop.xlane.xlu0 %467
      %v469 = vrcp.pop %v468
      %v470 = vmul.f32 %v465, %v469
      %v471 = vpack.c.bf16 %v470, %v470
      %v473 = vunpack.c.l.b16 %v289
      %v474 = vpack.c.b16 %v473, %v473
      %475 = vrot.lane.b32.xlu0 %v474, 120
      %v476 = vpop.permute.xlu0 %475
      %v478 = vsel %vm293, %v471, 0
      %v481 = vsel %vm356, %v476, 0
      %483 = vmatprep.subr.bf16.mxu0 0
      %484 = vmatpush1.bf16.msra.mxu0 %v481
      %485 = vmatprep.subr.bf16.mxu0 0
      %486 = vmatpush1.bf16.msra.mxu0 0
      %487 = vmatprep.subr.bf16.mxu0 0
      %488 = vmatpush1.bf16.msra.mxu0 0
      %489 = vmatprep.subr.bf16.mxu0 0
      %490 = vmatpush1.bf16.msra.mxu0 0
      %491 = vmatprep.subr.bf16.mxu0 0
      %492 = vmatpush1.bf16.msra.mxu0 0
      %493 = vmatprep.subr.bf16.mxu0 0
      %494 = vmatpush1.bf16.msra.mxu0 0
      %495 = vmatprep.subr.bf16.mxu0 0
      %496 = vmatpush1.bf16.msra.mxu0 0
      %497 = vmatprep.subr.bf16.mxu0 0
      %498 = vmatpush1.bf16.msra.mxu0 0
      %499 = vmatprep.subr.bf16.mxu0 0
      %500 = vmatpush1.bf16.msra.mxu0 0
      %501 = vmatprep.subr.bf16.mxu0 0
      %502 = vmatpush1.bf16.msra.mxu0 0
      %503 = vmatprep.subr.bf16.mxu0 0
      %504 = vmatpush1.bf16.msra.mxu0 0
      %505 = vmatprep.subr.bf16.mxu0 0
      %506 = vmatpush1.bf16.msra.mxu0 0
      %507 = vmatprep.subr.bf16.mxu0 0
      %508 = vmatpush1.bf16.msra.mxu0 0
      %509 = vmatprep.subr.bf16.mxu0 0
      %510 = vmatpush1.bf16.msra.mxu0 0
      %511 = vmatprep.subr.bf16.mxu0 0
      %512 = vmatpush1.bf16.msra.mxu0 0
      %513 = vmatprep.subr.bf16.mxu0 0
      %514 = vmatpush1.bf16.msra.mxu0 0
      %515 = vmatprep.mubr.bf16.mxu0 0
      %516 = vmatmul.mubr.bf16.gmra.mrb[0].mxu0 %v478
      %v517 = vpop.f32.mrb[0].mxu0
      %v518 = vadd.f32 0.0, %v517
      %v519 = vpop.f32.mrb[0].mxu0
      %v520 = vpop.f32.mrb[0].mxu0
      %v521 = vpop.f32.mrb[0].mxu0
      %522 = vdwg.mxu0
      %v523 = vpack.c.bf16 %v518, %v518
      %v525 = vunpack.c.l.b16 %v523
      %v526 = vpack.c.b16 %v525, %v525
      %527 = vrot.lane.b32.xlu0 %v526, 8
      %v528 = vpop.permute.xlu0 %527
      %vm530 = vcmask 126016
      %531 = vst.msk [vmem:[%s285] sm:$0xf] %vm530, %v528
      %532 = vrot.lane.b32.xlu0 %v405, 112
      %v533 = vpop.permute.xlu0 %532
      %534 = vrot.lane.b32.xlu0 %v410, 112
      %v535 = vpop.permute.xlu0 %534
      %v537 = vsel %vm293, %v533, 0
      %v540 = vsel %vm293, %v535, 0
      %542 = vmatprep.subr.bf16.mxu0 0
      %543 = vmatpush1.bf16.xpose.msra.mxu0 %v540
      %544 = vmatprep.subr.bf16.mxu0 0
      %545 = vmatpush1.bf16.xpose.msra.mxu0 0
      %546 = vmatprep.subr.bf16.mxu0 0
      %547 = vmatpush1.bf16.xpose.msra.mxu0 0
      %548 = vmatprep.subr.bf16.mxu0 0
      %549 = vmatpush1.bf16.xpose.msra.mxu0 0
      %550 = vmatprep.subr.bf16.mxu0 0
      %551 = vmatpush1.bf16.xpose.msra.mxu0 0
      %552 = vmatprep.subr.bf16.mxu0 0
      %553 = vmatpush1.bf16.xpose.msra.mxu0 0
      %554 = vmatprep.subr.bf16.mxu0 0
      %555 = vmatpush1.bf16.xpose.msra.mxu0 0
      %556 = vmatprep.subr.bf16.mxu0 0
      %557 = vmatpush1.bf16.xpose.msra.mxu0 0
      %558 = vmatprep.subr.bf16.mxu0 0
      %559 = vmatpush1.bf16.xpose.msra.mxu0 0
      %560 = vmatprep.subr.bf16.mxu0 0
      %561 = vmatpush1.bf16.xpose.msra.mxu0 0
      %562 = vmatprep.subr.bf16.mxu0 0
      %563 = vmatpush1.bf16.xpose.msra.mxu0 0
      %564 = vmatprep.subr.bf16.mxu0 0
      %565 = vmatpush1.bf16.xpose.msra.mxu0 0
      %566 = vmatprep.subr.bf16.mxu0 0
      %567 = vmatpush1.bf16.xpose.msra.mxu0 0
      %568 = vmatprep.subr.bf16.mxu0 0
      %569 = vmatpush1.bf16.xpose.msra.mxu0 0
      %570 = vmatprep.subr.bf16.mxu0 0
      %571 = vmatpush1.bf16.xpose.msra.mxu0 0
      %572 = vmatprep.subr.bf16.mxu0 0
      %573 = vmatpush1.bf16.xpose.msra.mxu0 0
      %574 = vmatprep.mubr.bf16.mxu0 0
      %575 = vmatmul.mubr.bf16.gmra.mrb[0].mxu0 %v537
      %v576 = vpop.f32.mrb[0].mxu0
      %v577 = vadd.f32 0.0, %v576
      %v578 = vpop.f32.mrb[0].mxu0
      %v579 = vpop.f32.mrb[0].mxu0
      %v580 = vpop.f32.mrb[0].mxu0
      %581 = vdwg.mxu0
      %v582 = vsel %vm292, -10000.0, %v577
      %v583 = vsel %vm293, %v582, -inf
      %584 = vmax.xlane.f32.xlu0 %v583
      %v585 = vpop.xlane.xlu0 %584
      %v586 = vsub.f32 %v582, %v585
      %v587 = vmul.f32 %v586, 1.442695
      %v588 = vpow.pop %v587
      %v589 = vsel %vm293, %v588, 0.0
      %590 = vadd.xlane.f32.xlu0 %v589
      %v591 = vpop.xlane.xlu0 %590
      %v592 = vrcp.pop %v591
      %v593 = vmul.f32 %v588, %v592
      %v594 = vpack.c.bf16 %v593, %v593
      %595 = vrot.lane.b32.xlu0 %v474, 112
      %v596 = vpop.permute.xlu0 %595
      %v598 = vsel %vm293, %v594, 0
      %v601 = vsel %vm356, %v596, 0
      %603 = vmatprep.subr.bf16.mxu0 0
      %604 = vmatpush1.bf16.msra.mxu0 %v601
      %605 = vmatprep.subr.bf16.mxu0 0
      %606 = vmatpush1.bf16.msra.mxu0 0
      %607 = vmatprep.subr.bf16.mxu0 0
      %608 = vmatpush1.bf16.msra.mxu0 0
      %609 = vmatprep.subr.bf16.mxu0 0
      %610 = vmatpush1.bf16.msra.mxu0 0
      %611 = vmatprep.subr.bf16.mxu0 0
      %612 = vmatpush1.bf16.msra.mxu0 0
      %613 = vmatprep.subr.bf16.mxu0 0
      %614 = vmatpush1.bf16.msra.mxu0 0
      %615 = vmatprep.subr.bf16.mxu0 0
      %616 = vmatpush1.bf16.msra.mxu0 0
      %617 = vmatprep.subr.bf16.mxu0 0
      %618 = vmatpush1.bf16.msra.mxu0 0
      %619 = vmatprep.subr.bf16.mxu0 0
      %620 = vmatpush1.bf16.msra.mxu0 0
      %621 = vmatprep.subr.bf16.mxu0 0
      %622 = vmatpush1.bf16.msra.mxu0 0
      %623 = vmatprep.subr.bf16.mxu0 0
      %624 = vmatpush1.bf16.msra.mxu0 0
      %625 = vmatprep.subr.bf16.mxu0 0
      %626 = vmatpush1.bf16.msra.mxu0 0
      %627 = vmatprep.subr.bf16.mxu0 0
      %628 = vmatpush1.bf16.msra.mxu0 0
      %629 = vmatprep.subr.bf16.mxu0 0
      %630 = vmatpush1.bf16.msra.mxu0 0
      %631 = vmatprep.subr.bf16.mxu0 0
      %632 = vmatpush1.bf16.msra.mxu0 0
      %633 = vmatprep.subr.bf16.mxu0 0
      %634 = vmatpush1.bf16.msra.mxu0 0
      %635 = vmatprep.mubr.bf16.mxu0 0
      %636 = vmatmul.mubr.bf16.gmra.mrb[0].mxu0 %v598
      %v637 = vpop.f32.mrb[0].mxu0
      %v638 = vadd.f32 0.0, %v637
      %v639 = vpop.f32.mrb[0].mxu0
      %v640 = vpop.f32.mrb[0].mxu0
      %v641 = vpop.f32.mrb[0].mxu0
      %642 = vdwg.mxu0
      %v643 = vpack.c.bf16 %v638, %v638
      %v645 = vunpack.c.l.b16 %v643
      %v646 = vpack.c.b16 %v645, %v645
      %647 = vrot.lane.b32.xlu0 %v646, 16
      %v648 = vpop.permute.xlu0 %647
      %vm650 = vcmask 191616
      %651 = vst.msk [vmem:[%s285] sm:$0xf] %vm650, %v648
      %652 = vrot.lane.b32.xlu0 %v405, 104
      %v653 = vpop.permute.xlu0 %652
      %654 = vrot.lane.b32.xlu0 %v410, 104
      %v655 = vpop.permute.xlu0 %654
      %v657 = vsel %vm293, %v653, 0
      %v660 = vsel %vm293, %v655, 0
      %662 = vmatprep.subr.bf16.mxu0 0
      %663 = vmatpush1.bf16.xpose.msra.mxu0 %v660
      %664 = vmatprep.subr.bf16.mxu0 0
      %665 = vmatpush1.bf16.xpose.msra.mxu0 0
      %666 = vmatprep.subr.bf16.mxu0 0
      %667 = vmatpush1.bf16.xpose.msra.mxu0 0
      %668 = vmatprep.subr.bf16.mxu0 0
      %669 = vmatpush1.bf16.xpose.msra.mxu0 0
      %670 = vmatprep.subr.bf16.mxu0 0
      %671 = vmatpush1.bf16.xpose.msra.mxu0 0
      %672 = vmatprep.subr.bf16.mxu0 0
      %673 = vmatpush1.bf16.xpose.msra.mxu0 0
      %674 = vmatprep.subr.bf16.mxu0 0
      %675 = vmatpush1.bf16.xpose.msra.mxu0 0
      %676 = vmatprep.subr.bf16.mxu0 0
      %677 = vmatpush1.bf16.xpose.msra.mxu0 0
      %678 = vmatprep.subr.bf16.mxu0 0
      %679 = vmatpush1.bf16.xpose.msra.mxu0 0
      %680 = vmatprep.subr.bf16.mxu0 0
      %681 = vmatpush1.bf16.xpose.msra.mxu0 0
      %682 = vmatprep.subr.bf16.mxu0 0
      %683 = vmatpush1.bf16.xpose.msra.mxu0 0
      %684 = vmatprep.subr.bf16.mxu0 0
      %685 = vmatpush1.bf16.xpose.msra.mxu0 0
      %686 = vmatprep.subr.bf16.mxu0 0
      %687 = vmatpush1.bf16.xpose.msra.mxu0 0
      %688 = vmatprep.subr.bf16.mxu0 0
      %689 = vmatpush1.bf16.xpose.msra.mxu0 0
      %690 = vmatprep.subr.bf16.mxu0 0
      %691 = vmatpush1.bf16.xpose.msra.mxu0 0
      %692 = vmatprep.subr.bf16.mxu0 0
      %693 = vmatpush1.bf16.xpose.msra.mxu0 0
      %694 = vmatprep.mubr.bf16.mxu0 0
      %695 = vmatmul.mubr.bf16.gmra.mrb[0].mxu0 %v657
      %v696 = vpop.f32.mrb[0].mxu0
      %v697 = vadd.f32 0.0, %v696
      %v698 = vpop.f32.mrb[0].mxu0
      %v699 = vpop.f32.mrb[0].mxu0
      %v700 = vpop.f32.mrb[0].mxu0
      %701 = vdwg.mxu0
      %v702 = vsel %vm292, -10000.0, %v697
      %v703 = vsel %vm293, %v702, -inf
      %704 = vmax.xlane.f32.xlu0 %v703
      %v705 = vpop.xlane.xlu0 %704
      %v706 = vsub.f32 %v702, %v705
      %v707 = vmul.f32 %v706, 1.442695
      %v708 = vpow.pop %v707
      %v709 = vsel %vm293, %v708, 0.0
      %710 = vadd.xlane.f32.xlu0 %v709
      %v711 = vpop.xlane.xlu0 %710
      %v712 = vrcp.pop %v711
      %v713 = vmul.f32 %v708, %v712
      %v714 = vpack.c.bf16 %v713, %v713
      %715 = vrot.lane.b32.xlu0 %v474, 104
      %v716 = vpop.permute.xlu0 %715
      %v718 = vsel %vm293, %v714, 0
      %v721 = vsel %vm356, %v716, 0
      %723 = vmatprep.subr.bf16.mxu0 0
      %724 = vmatpush1.bf16.msra.mxu0 %v721
      %725 = vmatprep.subr.bf16.mxu0 0
      %726 = vmatpush1.bf16.msra.mxu0 0
      %727 = vmatprep.subr.bf16.mxu0 0
      %728 = vmatpush1.bf16.msra.mxu0 0
      %729 = vmatprep.subr.bf16.mxu0 0
      %730 = vmatpush1.bf16.msra.mxu0 0
      %731 = vmatprep.subr.bf16.mxu0 0
      %732 = vmatpush1.bf16.msra.mxu0 0
      %733 = vmatprep.subr.bf16.mxu0 0
      %734 = vmatpush1.bf16.msra.mxu0 0
      %735 = vmatprep.subr.bf16.mxu0 0
      %736 = vmatpush1.bf16.msra.mxu0 0
      %737 = vmatprep.subr.bf16.mxu0 0
      %738 = vmatpush1.bf16.msra.mxu0 0
      %739 = vmatprep.subr.bf16.mxu0 0
      %740 = vmatpush1.bf16.msra.mxu0 0
      %741 = vmatprep.subr.bf16.mxu0 0
      %742 = vmatpush1.bf16.msra.mxu0 0
      %743 = vmatprep.subr.bf16.mxu0 0
      %744 = vmatpush1.bf16.msra.mxu0 0
      %745 = vmatprep.subr.bf16.mxu0 0
      %746 = vmatpush1.bf16.msra.mxu0 0
      %747 = vmatprep.subr.bf16.mxu0 0
      %748 = vmatpush1.bf16.msra.mxu0 0
      %749 = vmatprep.subr.bf16.mxu0 0
      %750 = vmatpush1.bf16.msra.mxu0 0
      %751 = vmatprep.subr.bf16.mxu0 0
      %752 = vmatpush1.bf16.msra.mxu0 0
      %753 = vmatprep.subr.bf16.mxu0 0
      %754 = vmatpush1.bf16.msra.mxu0 0
      %755 = vmatprep.mubr.bf16.mxu0 0
      %756 = vmatmul.mubr.bf16.gmra.mrb[0].mxu0 %v718
      %v757 = vpop.f32.mrb[0].mxu0
      %v758 = vadd.f32 0.0, %v757
      %v759 = vpop.f32.mrb[0].mxu0
      %v760 = vpop.f32.mrb[0].mxu0
      %v761 = vpop.f32.mrb[0].mxu0
      %762 = vdwg.mxu0
      %v763 = vpack.c.bf16 %v758, %v758
      %v765 = vunpack.c.l.b16 %v763
      %v766 = vpack.c.b16 %v765, %v765
      %767 = vrot.lane.b32.xlu0 %v766, 24
      %v768 = vpop.permute.xlu0 %767
      %vm770 = vcmask 257216
      %771 = vst.msk [vmem:[%s285] sm:$0xf] %vm770, %v768
      %p772 = scmp.lt.s32.totalorder %s19, 1
      %s773 = scalar_select %p772, %s19, 1
      %p774 = scmp.lt.s32.totalorder %s20, 0
      %s775 = scalar_select %p774, %s20, 0
      %s776 = sadd.s32 %s775, %s773
      %s777 = smul.addr %s776, 4
      %s778 = scalar_lea.vmem %s4, %s777
      // Predicated region
      $region37: #{multi_head_attention.8} parent=35 // pred_check
        %p779 = pneg %p155
      $region38: #{multi_head_attention.8} parent=35 // pred_check_branch
        %781 = sbr.rel (%p779) target = $region40
      $region39: #{multi_head_attention.8} parent=35 // pred_region
        _
      $region40: #{multi_head_attention.8} parent=35 // pred_fallthru
        _
    $region36: #{multi_head_attention.8} parent=5 // pred_fallthru
      _
    %p782 = scmp.le.s32.totalorder 2, %s10
    // Predicated region
    $region41: #{multi_head_attention.8} parent=5 // pred_check
      %p783 = pneg %p782
    $region42: #{multi_head_attention.8} parent=5 // pred_check_branch
      %785 = sbr.rel (%p783) target = $region44
    $region43: #{multi_head_attention.8} parent=5 // pred_region
      %s786 = ssub.s32 %s10, 2
      // Predicated region
      $region45: #{multi_head_attention.8} parent=43 // pred_check
        %p787 = pneg %p161
      $region46: #{multi_head_attention.8} parent=43 // pred_check_branch
        %789 = sbr.rel (%p787) target = $region48
      $region47: #{multi_head_attention.8} parent=43 // pred_region
        %p790 = scmp.lt.s32.totalorder %s21, 1
        %s791 = scalar_select %p790, %s21, 1
        %p792 = scmp.lt.s32.totalorder %s22, 0
        %s793 = scalar_select %p792, %s22, 0
        %s794 = sadd.s32 %s793, %s791
        %s795 = smul.addr %s794, 4
        %s796 = scalar_lea.vmem %s4, %s795
      $region48: #{multi_head_attention.8} parent=43 // pred_fallthru
        _
    $region44: #{multi_head_attention.8} parent=5 // pred_fallthru
      _
  $region6: #{multi_head_attention.8} parent=0 // loop_footer
    %s14 = sadd.s32 1, %s10
  $region7: #{multi_head_attention.8} parent=0 // loop_footer_branch
    %9 = sbr.rel target = $region3
  $region8: #{multi_head_attention.8} parent=0 // loop_exit
    _

</llo_original>
